<compile_context>
chip_gen: v7x
topology: tpu7x:2x2x1
jax: 0.10.0
libtpu: 0.0.40
codegen_flags: <defaults>
</compile_context>

<pallas_src>
import functools

import jax
import jax.numpy as jnp
from jax.experimental import pallas as pl
from jax.experimental.pallas import tpu as pltpu


def _pool_att_ff_kernel(x_ref, w1_ref, b1_ref, w2_ref, b2_ref, w3_ref, b3_ref,
                        o_ref, *, t_valid: int):
    """Per-grid-step refs:

    x_ref : (bb, T, D)   VMEM   (bb = batch tile; f32 or bf16)
    w1_ref: (D, 2D)      VMEM   b1_ref: (1, 2D) VMEM
    w2_ref: (1, 2D)      VMEM   b2_ref: (1, 1)  SMEM (scalar)
    w3_ref: (1, D)       VMEM   b3_ref: (1, 1)  SMEM (scalar)
    o_ref : (1, bb)      VMEM   (lane-dense output row)
    """
    bb, T, D = x_ref.shape
    H = w1_ref.shape[1]

    x = x_ref[...]                                    # (bb, T, D)
    x2d = x.reshape(bb * T, D)                        # layout no-op (T padded to sublane mult.)

    # linear1 + ReLU: one MXU push with M = bb*T rows, f32 accumulate.
    # (dropout is identity at inference)
    h = jnp.dot(x2d, w1_ref[...], preferred_element_type=jnp.float32)
    h = jnp.maximum(h + b1_ref[...], 0.0)             # (bb*T, H), f32

    # linear2 as VPU multiply + lane reduce -> lane-dense (bb, T) logits.
    h3 = h.reshape(bb, T, H)
    w2v = w2_ref[...].reshape(1, 1, H)
    logits = jnp.sum(h3 * w2v, axis=-1) + b2_ref[0, 0]          # (bb, T), f32

    # Mask padded time steps (wrapper may have padded T up to a sublane multiple).
    if t_valid < T:
        t_idx = jax.lax.broadcasted_iota(jnp.int32, (bb, T), 1)
        logits = jnp.where(t_idx < t_valid, logits, -jnp.inf)

    # Numerically stable softmax over time (lane axis).  The reciprocal is over a
    # (bb, 1) vector only, so the exact version is essentially free.
    m = jnp.max(logits, axis=-1, keepdims=True)       # (bb, 1)
    e = jnp.exp(logits - m)                           # (bb, T)
    s = jnp.sum(e, axis=-1, keepdims=True)            # (bb, 1)
    att = e * pl.reciprocal(s, approx=False)          # (bb, T)

    # Re-associated tail: out = att @ (x @ w3) + b3.
    # xw3 is another lane-dense (bb, T) VPU/XLU pass; no M=1 MXU matmuls, no (bb, D)
    # pooled intermediate.  Mathematically identical by associativity (f32 products).
    w3v = w3_ref[...].reshape(1, 1, D)
    xw3 = jnp.sum(x * w3v, axis=-1)                   # (bb, T), f32 (bf16 x promotes)
    out = jnp.sum(att * xw3, axis=-1) + b3_ref[0, 0]  # (bb,)

    # Single lane-dense full-block store.
    o_ref[...] = out.reshape(1, bb).astype(o_ref.dtype)


def _auto_batch_block(B, T_pad, D, H, x_itemsize, w_itemsize, budget_bytes):
    """Largest divisor of B whose VMEM footprint (incl. f32 hidden temp) fits budget."""
    for bb in [d for d in range(B, 0, -1) if B % d == 0]:
        x_tile = 2 * bb * T_pad * D * x_itemsize      # double-buffered x tile
        h_tmp = bb * T_pad * H * 4                    # f32 hidden after linear1 (the real hog)
        w_res = 2 * D * H * w_itemsize                # resident w1 (counted double-buffered)
        misc = (2 * H + D) * 4 + 4 * bb
        if x_tile + h_tmp + w_res + misc <= budget_bytes:
            return bb
    return 1


def pool_att_ff(x, w1, b1, w2, b2, w3, b3, *, batch_block=None, bf16_matmul=False,
                vmem_budget_bytes=14 << 20):
    """x: (B, T, D); w1: (D, 2D); b1: (2D,); w2: (2D, 1); b2: (1,); w3: (D, 1); b3: (1,).

    bf16_matmul=True casts x and w1 to bf16 in the wrapper (valid on v5e/v6e/v7x; halves
    HBM traffic for the streamed x).  The default vmem_budget_bytes stays below every
    generation's default scoped-VMEM limit (v5e 16 MiB / v6e 32 / v7x 32); raise it and
    pass pltpu.CompilerParams(vmem_limit_bytes=...) for bigger tiles on v6e.
    """
    B, T, D = x.shape
    H = w1.shape[1]

    x_dtype = jnp.bfloat16 if bf16_matmul else jnp.float32
    x_itemsize = 2 if bf16_matmul else 4

    # Pad T to a sublane multiple (16 for packed bf16, 8 for f32) so the in-kernel
    # merged/split leading-dim reshapes are layout no-ops.  Padded steps are masked
    # to -inf before the softmax inside the kernel.
    sub = 16 if bf16_matmul else 8
    T_pad = -(-T // sub) * sub
    if T_pad != T:
        x = jnp.pad(x, ((0, 0), (0, T_pad - T), (0, 0)))

    if batch_block is None:
        batch_block = _auto_batch_block(B, T_pad, D, H, x_itemsize, x_itemsize,
                                        vmem_budget_bytes)
    assert B % batch_block == 0, (B, batch_block)
    grid = (B // batch_block,)

    # Casts happen here (XLA side), not per grid step inside the kernel.
    x_in = x.astype(x_dtype)
    w1_in = w1.astype(x_dtype)

    # Lane-dense weight/bias layouts; scalar biases go to SMEM (no padded VMEM tiles).
    b1r = b1.reshape(1, H).astype(jnp.float32)
    w2r = w2.reshape(1, H).astype(jnp.float32)
    b2r = b2.reshape(1, 1).astype(jnp.float32)
    w3r = w3.reshape(1, D).astype(jnp.float32)
    b3r = b3.reshape(1, 1).astype(jnp.float32)

    kernel = functools.partial(_pool_att_ff_kernel, t_valid=T)
    smem = pl.BlockSpec(memory_space=pltpu.MemorySpace.SMEM)

    out2d = pl.pallas_call(
        kernel,
        out_shape=jax.ShapeDtypeStruct((B // batch_block, batch_block), jnp.float32),
        grid=grid,
        in_specs=[
            pl.BlockSpec((batch_block, T_pad, D), lambda i: (i, 0, 0)),  # x: blocked over batch
            pl.BlockSpec((D, H), lambda i: (0, 0)),                      # w1: VMEM-resident
            pl.BlockSpec((1, H), lambda i: (0, 0)),                      # b1
            pl.BlockSpec((1, H), lambda i: (0, 0)),                      # w2 (lane-dense row)
            smem,                                                        # b2 (scalar, SMEM)
            pl.BlockSpec((1, D), lambda i: (0, 0)),                      # w3 (lane-dense row)
            smem,                                                        # b3 (scalar, SMEM)
        ],
        out_specs=pl.BlockSpec((1, batch_block), lambda i: (i, 0)),      # lane-dense row out
        compiler_params=pltpu.CompilerParams(
            dimension_semantics=("parallel",)),      # shards batch across TCs on v7x
    )(x_in, w1_in, b1r, w2r, b2r, w3r, b3r)

    return out2d.reshape(B, 1)


def pool_att_ff_reference(x, w1, b1, w2, b2, w3, b3):
    """Pure-JAX reference mirroring the PyTorch forward (eval mode)."""
    h = jax.nn.relu(x @ w1 + b1)                     # (B, T, 2D)
    att = h @ w2 + b2                                # (B, T, 1)
    att = jnp.transpose(att, (0, 2, 1))              # (B, 1, T)
    att = jax.nn.softmax(att, axis=2)                # (B, 1, T)
    pooled = jnp.matmul(att, x)[:, 0, :]             # (B, D)
    return pooled @ w3 + b3                          # (B, 1)


if __name__ == "__main__":
    B, T, D = 2, 8, 32          # dim_head_in = D
    H = 2 * D

    key = jax.random.PRNGKey(0)
    kx, k1, k2, k3, k4, k5, k6 = jax.random.split(key, 7)

    x = jax.random.normal(kx, (B, T, D), dtype=jnp.float32)

    # Deterministic synthetic parameters (shapes from the module __init__).
    w1 = jax.random.normal(k1, (D, H), dtype=jnp.float32) * 0.05   # linear1.weight^T
    b1 = jax.random.normal(k2, (H,), dtype=jnp.float32) * 0.05     # linear1.bias
    w2 = jax.random.normal(k3, (H, 1), dtype=jnp.float32) * 0.05   # linear2.weight^T
    b2 = jax.random.normal(k4, (1,), dtype=jnp.float32) * 0.05     # linear2.bias
    w3 = jax.random.normal(k5, (D, 1), dtype=jnp.float32) * 0.05   # linear3.weight^T
    b3 = jax.random.normal(k6, (1,), dtype=jnp.float32) * 0.05     # linear3.bias

    ref = pool_att_ff_reference(x, w1, b1, w2, b2, w3, b3)

    # 1) f32 MXU path, T already a sublane multiple: tight tolerance (exact reciprocal).
    out = jax.block_until_ready(pool_att_ff(x, w1, b1, w2, b2, w3, b3))
    assert out.shape == (B, 1), out.shape
    assert jnp.allclose(out, ref, rtol=1e-4, atol=1e-5), (out, ref)

    # 2) T not a multiple of 8: exercises wrapper padding + in-kernel -inf masking.
    T2 = 13
    x2 = jax.random.normal(kx, (B, T2, D), dtype=jnp.float32)
    ref2 = pool_att_ff_reference(x2, w1, b1, w2, b2, w3, b3)
    out2 = jax.block_until_ready(pool_att_ff(x2, w1, b1, w2, b2, w3, b3))
    assert jnp.allclose(out2, ref2, rtol=1e-4, atol=1e-5), (out2, ref2)

    # 3) bf16 MXU path (wrapper-side casts; looser tolerance for bf16 linear1 inputs).
    out_bf16 = jax.block_until_ready(
        pool_att_ff(x, w1, b1, w2, b2, w3, b3, bf16_matmul=True))
    assert jnp.allclose(out_bf16, ref, rtol=3e-2, atol=3e-2), (out_bf16, ref)

    print("KERNEL_OK")
</pallas_src>

<mosaic_0001>
module attributes {stable_mosaic.version = 11 : i64} {
  func.func @_pool_att_ff_kernel(%arg0: i32, %arg1: memref<2x8x32xf32, #tpu.memory_space<vmem>>, %arg2: memref<32x64xf32, #tpu.memory_space<vmem>>, %arg3: memref<1x64xf32, #tpu.memory_space<vmem>>, %arg4: memref<1x64xf32, #tpu.memory_space<vmem>>, %arg5: memref<1x1xf32, #tpu.memory_space<smem>>, %arg6: memref<1x32xf32, #tpu.memory_space<vmem>>, %arg7: memref<1x1xf32, #tpu.memory_space<smem>>, %arg8: memref<1x2xf32, #tpu.memory_space<vmem>>) attributes {dimension_semantics = [#tpu.dimension_semantics<parallel>], iteration_bounds = array<i64: 1>, scalar_prefetch = 0 : i64, scratch_operands = 0 : i64, tpu.core_type = #tpu.core_type<tc>, window_params = [{transform_indices = @transform_0, window_bounds = array<i64: 2, 8, 32>}, {pipeline_mode = #tpu.pipeline_mode<synchronous>, transform_indices = @transform_1, window_bounds = array<i64: 32, 64>}, {pipeline_mode = #tpu.pipeline_mode<synchronous>, transform_indices = @transform_2, window_bounds = array<i64: 1, 64>}, {pipeline_mode = #tpu.pipeline_mode<synchronous>, transform_indices = @transform_3, window_bounds = array<i64: 1, 64>}, {transform_indices = @transform_4, window_bounds = array<i64: 1, 1>}, {pipeline_mode = #tpu.pipeline_mode<synchronous>, transform_indices = @transform_5, window_bounds = array<i64: 1, 32>}, {transform_indices = @transform_6, window_bounds = array<i64: 1, 1>}, {transform_indices = @transform_7, window_bounds = array<i64: 1, 2>}]} {
    %c0 = arith.constant 0 : index
    %c0_0 = arith.constant 0 : index
    %c0_1 = arith.constant 0 : index
    %0 = vector.load %arg1[%c0, %c0_0, %c0_1] : memref<2x8x32xf32, #tpu.memory_space<vmem>>, vector<2x8x32xf32>
    %1 = vector.shape_cast %0 : vector<2x8x32xf32> to vector<16x32xf32>
    %c0_2 = arith.constant 0 : index
    %c0_3 = arith.constant 0 : index
    %2 = vector.load %arg2[%c0_2, %c0_3] : memref<32x64xf32, #tpu.memory_space<vmem>>, vector<32x64xf32>
    %cst = arith.constant dense<0.000000e+00> : vector<16x64xf32>
    %3 = tpu.matmul %1, %2, %cst {dimension_numbers = #tpu.dot_dimension_numbers<[1], [0], [0], [1], [0, 0, 1, 1], [], []>} : vector<16x32xf32>, vector<32x64xf32>, vector<16x64xf32> -> vector<16x64xf32>
    %c0_4 = arith.constant 0 : index
    %c0_5 = arith.constant 0 : index
    %4 = vector.load %arg3[%c0_4, %c0_5] : memref<1x64xf32, #tpu.memory_space<vmem>>, vector<1x64xf32>
    %5 = vector.broadcast %4 : vector<1x64xf32> to vector<16x64xf32>
    %6 = arith.addf %3, %5 : vector<16x64xf32>
    %cst_6 = arith.constant 0.000000e+00 : f32
    %7 = vector.broadcast %cst_6 : f32 to vector<16x64xf32>
    %8 = arith.maximumf %6, %7 : vector<16x64xf32>
    %9 = vector.shape_cast %8 : vector<16x64xf32> to vector<2x8x64xf32>
    %c0_7 = arith.constant 0 : index
    %c0_8 = arith.constant 0 : index
    %10 = vector.load %arg4[%c0_7, %c0_8] : memref<1x64xf32, #tpu.memory_space<vmem>>, vector<1x64xf32>
    %11 = vector.shape_cast %10 : vector<1x64xf32> to vector<1x1x64xf32>
    %12 = vector.broadcast %11 : vector<1x1x64xf32> to vector<2x8x64xf32>
    %13 = arith.mulf %9, %12 : vector<2x8x64xf32>
    %cst_9 = arith.constant dense<0.000000e+00> : vector<2x8xf32>
    %14 = vector.multi_reduction <add>, %13, %cst_9 [2] : vector<2x8x64xf32> to vector<2x8xf32>
    %c0_10 = arith.constant 0 : index
    %c0_11 = arith.constant 0 : index
    %15 = memref.load %arg5[%c0_10, %c0_11] : memref<1x1xf32, #tpu.memory_space<smem>>
    %16 = vector.broadcast %15 : f32 to vector<2x8xf32>
    %17 = arith.addf %14, %16 : vector<2x8xf32>
    %cst_12 = arith.constant dense<0xFF800000> : vector<2xf32>
    %18 = vector.multi_reduction <maximumf>, %17, %cst_12 [1] : vector<2x8xf32> to vector<2xf32>
    %19 = vector.shape_cast %18 : vector<2xf32> to vector<2x1xf32>
    %20 = vector.broadcast %19 : vector<2x1xf32> to vector<2x8xf32>
    %21 = arith.subf %17, %20 : vector<2x8xf32>
    %22 = math.exp %21 : vector<2x8xf32>
    %cst_13 = arith.constant dense<0.000000e+00> : vector<2xf32>
    %23 = vector.multi_reduction <add>, %22, %cst_13 [1] : vector<2x8xf32> to vector<2xf32>
    %24 = vector.shape_cast %23 : vector<2xf32> to vector<2x1xf32>
    %25 = tpu.reciprocal %24 : vector<2x1xf32> -> vector<2x1xf32>
    %26 = vector.broadcast %25 : vector<2x1xf32> to vector<2x8xf32>
    %27 = arith.mulf %22, %26 : vector<2x8xf32>
    %c0_14 = arith.constant 0 : index
    %c0_15 = arith.constant 0 : index
    %28 = vector.load %arg6[%c0_14, %c0_15] : memref<1x32xf32, #tpu.memory_space<vmem>>, vector<1x32xf32>
    %29 = vector.shape_cast %28 : vector<1x32xf32> to vector<1x1x32xf32>
    %30 = vector.broadcast %29 : vector<1x1x32xf32> to vector<2x8x32xf32>
    %31 = arith.mulf %0, %30 : vector<2x8x32xf32>
    %cst_16 = arith.constant dense<0.000000e+00> : vector<2x8xf32>
    %32 = vector.multi_reduction <add>, %31, %cst_16 [2] : vector<2x8x32xf32> to vector<2x8xf32>
    %33 = arith.mulf %27, %32 : vector<2x8xf32>
    %cst_17 = arith.constant dense<0.000000e+00> : vector<2xf32>
    %34 = vector.multi_reduction <add>, %33, %cst_17 [1] : vector<2x8xf32> to vector<2xf32>
    %c0_18 = arith.constant 0 : index
    %c0_19 = arith.constant 0 : index
    %35 = memref.load %arg7[%c0_18, %c0_19] : memref<1x1xf32, #tpu.memory_space<smem>>
    %36 = vector.broadcast %35 : f32 to vector<2xf32>
    %37 = arith.addf %34, %36 : vector<2xf32>
    %38 = vector.shape_cast %37 : vector<2xf32> to vector<1x2xf32>
    %c0_20 = arith.constant 0 : index
    %c0_21 = arith.constant 0 : index
    %39 = vector.load %arg8[%c0_20, %c0_21] : memref<1x2xf32, #tpu.memory_space<vmem>>, vector<1x2xf32>
    tpu.vector_store %arg8[%c0_20, %c0_21], %38 {strides = array<i32>} : memref<1x2xf32, #tpu.memory_space<vmem>>, vector<1x2xf32>,
    return
  }
  func.func @transform_0(%arg0: i32) -> (i32, i32, i32) {
    %c0_i32 = arith.constant 0 : i32
    %c0_i32_0 = arith.constant 0 : i32
    %c0_i32_1 = arith.constant 0 : i32
    return %arg0, %c0_i32, %c0_i32_0 : i32, i32, i32
  }
  func.func @transform_1(%arg0: i32) -> (i32, i32) {
    %c0_i32 = arith.constant 0 : i32
    %c0_i32_0 = arith.constant 0 : i32
    %c0_i32_1 = arith.constant 0 : i32
    return %c0_i32, %c0_i32_0 : i32, i32
  }
  func.func @transform_2(%arg0: i32) -> (i32, i32) {
    %c0_i32 = arith.constant 0 : i32
    %c0_i32_0 = arith.constant 0 : i32
    %c0_i32_1 = arith.constant 0 : i32
    return %c0_i32, %c0_i32_0 : i32, i32
  }
  func.func @transform_3(%arg0: i32) -> (i32, i32) {
    %c0_i32 = arith.constant 0 : i32
    %c0_i32_0 = arith.constant 0 : i32
    %c0_i32_1 = arith.constant 0 : i32
    return %c0_i32, %c0_i32_0 : i32, i32
  }
  func.func @transform_4(%arg0: i32) -> (i32, i32) {
    %c0_i32 = arith.constant 0 : i32
    %c0_i32_0 = arith.constant 0 : i32
    %c0_i32_1 = arith.constant 0 : i32
    return %c0_i32, %c0_i32_0 : i32, i32
  }
  func.func @transform_5(%arg0: i32) -> (i32, i32) {
    %c0_i32 = arith.constant 0 : i32
    %c0_i32_0 = arith.constant 0 : i32
    %c0_i32_1 = arith.constant 0 : i32
    return %c0_i32, %c0_i32_0 : i32, i32
  }
  func.func @transform_6(%arg0: i32) -> (i32, i32) {
    %c0_i32 = arith.constant 0 : i32
    %c0_i32_0 = arith.constant 0 : i32
    %c0_i32_1 = arith.constant 0 : i32
    return %c0_i32, %c0_i32_0 : i32, i32
  }
  func.func @transform_7(%arg0: i32) -> (i32, i32) {
    %c0_i32 = arith.constant 0 : i32
    %c0_i32_0 = arith.constant 0 : i32
    return %arg0, %c0_i32 : i32, i32
  }
}

</mosaic_0001>

<llo_original>
// kernel: tpu_custom_call.1
$region0: #{tpu_custom_call.1}
  #allocation0 [shape = 'u32[]', space=smem, size = 0x4, offset = 0x4, fixed_abs, tag = 'smem constant byte address 0x4 - core index']
  #allocation1 [shape = 'u32[144,128]{1,0:T(1,128)}', space=vmem, size = 0x12000, scoped, tag = 'internal scratch']
  #allocation2 [shape = 'f32[1,1]{1,0:T(1,128)S(6)}', space=smem, size = 0x200, scoped, tag = 'scoped memory for tpu_custom_call.1']
  #allocation3 [shape = 'f32[1,1]{1,0:T(1,128)S(6)}', space=smem, size = 0x200, scoped, tag = 'scoped memory for tpu_custom_call.1']
  %s0 = inlined_call_operand.hbm [shape: f32[2,8,32], index: 0, kind: input, shape index: {}]
  %s1 = inlined_call_operand.hbm [shape: f32[32,64], index: 1, kind: input, shape index: {}]
  %s2 = inlined_call_operand.vmem [shape: f32[1,64], index: 2, kind: input, shape index: {}]
  %s3 = inlined_call_operand.vmem [shape: f32[1,64], index: 3, kind: input, shape index: {}]
  %s4 = inlined_call_operand.<no memory space> [shape: f32[1,1], index: 4, kind: input, shape index: {}]
  %s5 = inlined_call_operand.vmem [shape: f32[1,32], index: 5, kind: input, shape index: {}]
  %s6 = inlined_call_operand.<no memory space> [shape: f32[1,1], index: 6, kind: input, shape index: {}]
  %s7 = inlined_call_operand.hbm [shape: f32[1,2], index: 7, kind: output, shape index: {}]
  %s8 = sld [smem:[#allocation0]]
  $region46: #{tpu_custom_call.1} parent=0
    _
  %s10 = ssub.s32 1, %s8
  %s11 = scalar_select 0, %s10, %s8
  %12 = sst [smem:[#allocation2]] %s4
  %13 = sst [smem:[#allocation3]] %s6
  $region1: #{tpu_custom_call.1} parent=0
    #allocation4 [shape = 'u8[8192]{0}', space=vmem, size = 0x2000, scoped, tag = 'input window, operand 0, single buffered']
    #allocation5 [shape = 's32[1]{0}', space=sflag, size = 0x4, scoped, tag = 'scoped memory for tpu_custom_call.1']
    #allocation6 [shape = 's32[1]{0}', space=sflag, size = 0x4, scoped, tag = 'scoped memory for tpu_custom_call.1']
    #allocation7 [shape = 'u8[16384]{0}', space=vmem, size = 0x4000, scoped, tag = 'input window, operand 1, single buffered']
    #allocation8 [shape = 's32[1]{0}', space=sflag, size = 0x4, scoped, tag = 'scoped memory for tpu_custom_call.1']
    #allocation9 [shape = 'u8[512]{0}', space=vmem, size = 0x400, scoped, tag = 'output window, operand 0, single buffered']
    %14 = vsyncpa [#allocation5], 0
    %15 = vsyncpa [#allocation8], 0
    %16 = vsyncpa [#allocation6], 0
    // Predicated region
    $region2: #{tpu_custom_call.1} parent=1 // pred_check
      _
    $region3: #{tpu_custom_call.1} parent=1 // pred_check_branch
      %18 = sbr.rel (0) target = $region5
    $region4: #{tpu_custom_call.1} parent=1 // pred_region
      %s20 = ssub.s32 256, 256
      %21 = vsyncadd [#allocation5], %s20
      %s22 = sshll.u32 [#allocation4], 4
      %s23 = int_to_ptr.vmem [resolvable:$true] %s22
      %28 = dma.hbm_to_vmem [thread:$0]  %s0, 256, %s23, [#allocation5], 128, 128, 8
    $region5: #{tpu_custom_call.1} parent=1 // pred_fallthru
      _
    // Predicated region
    $region6: #{tpu_custom_call.1} parent=1 // pred_check
      _
    $region7: #{tpu_custom_call.1} parent=1 // pred_check_branch
      %30 = sbr.rel (0) target = $region9
    $region8: #{tpu_custom_call.1} parent=1 // pred_region
      %s32 = ssub.s32 512, 512
      %33 = vsyncadd [#allocation8], %s32
      %s34 = sshll.u32 [#allocation7], 4
      %s35 = int_to_ptr.vmem [resolvable:$true] %s34
      %40 = dma.hbm_to_vmem [thread:$0]  %s1, 512, %s35, [#allocation8], 128, 128, 8
    $region9: #{tpu_custom_call.1} parent=1 // pred_fallthru
      _
    // Predicated region
    $region10: #{tpu_custom_call.1} parent=1 // pred_check
      _
    $region11: #{tpu_custom_call.1} parent=1 // pred_check_branch
      %42 = sbr.rel (0) target = $region13
    $region12: #{tpu_custom_call.1} parent=1 // pred_region
      _
    $region13: #{tpu_custom_call.1} parent=1 // pred_fallthru
      _
    // Predicated region
    $region14: #{tpu_custom_call.1} parent=1 // pred_check
      _
    $region15: #{tpu_custom_call.1} parent=1 // pred_check_branch
      %44 = sbr.rel (0) target = $region17
    $region16: #{tpu_custom_call.1} parent=1 // pred_region
      _
    $region17: #{tpu_custom_call.1} parent=1 // pred_fallthru
      _
    // Predicated region
    $region18: #{tpu_custom_call.1} parent=1 // pred_check
      _
    $region19: #{tpu_custom_call.1} parent=1 // pred_check_branch
      %46 = sbr.rel (0) target = $region21
    $region20: #{tpu_custom_call.1} parent=1 // pred_region
      _
    $region21: #{tpu_custom_call.1} parent=1 // pred_fallthru
      _
    // Predicated region
    $region22: #{tpu_custom_call.1} parent=1 // pred_check
      _
    $region23: #{tpu_custom_call.1} parent=1 // pred_check_branch
      %48 = sbr.rel (0) target = $region25
    $region24: #{tpu_custom_call.1} parent=1 // pred_region
      _
    $region25: #{tpu_custom_call.1} parent=1 // pred_fallthru
      _
    // Predicated region
    $region26: #{tpu_custom_call.1} parent=1 // pred_check
      _
    $region27: #{tpu_custom_call.1} parent=1 // pred_check_branch
      %50 = sbr.rel (0) target = $region29
    $region28: #{tpu_custom_call.1} parent=1 // pred_region
      _
    $region29: #{tpu_custom_call.1} parent=1 // pred_fallthru
      _
    // Predicated region
    $region30: #{tpu_custom_call.1} parent=1 // pred_check
      _
    $region31: #{tpu_custom_call.1} parent=1 // pred_check_branch
      %52 = sbr.rel (0) target = $region33
    $region32: #{tpu_custom_call.1} parent=1 // pred_region
      %53 = dma.done [#allocation5], 256
    $region33: #{tpu_custom_call.1} parent=1 // pred_fallthru
      _
    // Predicated region
    $region34: #{tpu_custom_call.1} parent=1 // pred_check
      _
    $region35: #{tpu_custom_call.1} parent=1 // pred_check_branch
      %55 = sbr.rel (0) target = $region37
    $region36: #{tpu_custom_call.1} parent=1 // pred_region
      %56 = dma.done [#allocation8], 512
    $region37: #{tpu_custom_call.1} parent=1 // pred_fallthru
      _
    %v57 = vld [vmem:[#allocation4] sm:$0xff]
    %v58 = vld [vmem:[#allocation4 + $0x8] sm:$0xff]
    %v59 = vld [vmem:[#allocation7] sm:$0xff]
    %v60 = vld [vmem:[#allocation7 + $0x8] sm:$0xff]
    %v61 = vld [vmem:[#allocation7 + $0x10] sm:$0xff]
    %v62 = vld [vmem:[#allocation7 + $0x18] sm:$0xff]
    %v63 = vld [vmem:[%s2] sm:$0x1]
    %v65 = vlaneseq
    %v66 = vshrl.u32 %v65, 7
    %v67 = vsub.s32 0, %v66
    %v68 = vrot.slane %v63, %v67
    %vm70 = vcmask 261120
    %v72 = vsel %vm70, %v57, 0
    %v75 = vsel %vm70, %v58, 0
    %77 = vmatprep.subr.mxu0 0.0
    %78 = vmatpush1.msra.mxu0 %v59
    %79 = vmatprep.subr.mxu0 0.0
    %80 = vmatpush1.msra.mxu0 %v60
    %81 = vmatprep.subr.mxu0 0.0
    %82 = vmatpush1.msra.mxu0 %v61
    %83 = vmatprep.subr.mxu0 0.0
    %84 = vmatpush1.msra.mxu0 %v62
    %85 = vmatprep.subr.mxu0 0.0
    %86 = vmatpush1.msra.mxu0 0.0
    %87 = vmatprep.subr.mxu0 0.0
    %88 = vmatpush1.msra.mxu0 0.0
    %89 = vmatprep.subr.mxu0 0.0
    %90 = vmatpush1.msra.mxu0 0.0
    %91 = vmatprep.subr.mxu0 0.0
    %92 = vmatpush1.msra.mxu0 0.0
    %93 = vmatprep.subr.mxu0 0.0
    %94 = vmatpush1.msra.mxu0 0.0
    %95 = vmatprep.subr.mxu0 0.0
    %96 = vmatpush1.msra.mxu0 0.0
    %97 = vmatprep.subr.mxu0 0.0
    %98 = vmatpush1.msra.mxu0 0.0
    %99 = vmatprep.subr.mxu0 0.0
    %100 = vmatpush1.msra.mxu0 0.0
    %101 = vmatprep.subr.mxu0 0.0
    %102 = vmatpush1.msra.mxu0 0.0
    %103 = vmatprep.subr.mxu0 0.0
    %104 = vmatpush1.msra.mxu0 0.0
    %105 = vmatprep.subr.mxu0 0.0
    %106 = vmatpush1.msra.mxu0 0.0
    %107 = vmatprep.subr.mxu0 0.0
    %108 = vmatpush1.msra.mxu0 0.0
    %109 = vmatprep.subr.mxu0 0.0
    %110 = vmatpush1.msra.mxu0 0.0
    %111 = vmatprep.subr.mxu0 0.0
    %112 = vmatpush1.msra.mxu0 0.0
    %113 = vmatprep.subr.mxu0 0.0
    %114 = vmatpush1.msra.mxu0 0.0
    %115 = vmatprep.subr.mxu0 0.0
    %116 = vmatpush1.msra.mxu0 0.0
    %117 = vmatprep.subr.mxu0 0.0
    %118 = vmatpush1.msra.mxu0 0.0
    %119 = vmatprep.subr.mxu0 0.0
    %120 = vmatpush1.msra.mxu0 0.0
    %121 = vmatprep.subr.mxu0 0.0
    %122 = vmatpush1.msra.mxu0 0.0
    %123 = vmatprep.subr.mxu0 0.0
    %124 = vmatpush1.msra.mxu0 0.0
    %125 = vmatprep.subr.mxu0 0.0
    %126 = vmatpush1.msra.mxu0 0.0
    %127 = vmatprep.subr.mxu0 0.0
    %128 = vmatpush1.msra.mxu0 0.0
    %129 = vmatprep.subr.mxu0 0.0
    %130 = vmatpush1.msra.mxu0 0.0
    %131 = vmatprep.subr.mxu0 0.0
    %132 = vmatpush1.msra.mxu0 0.0
    %133 = vmatprep.subr.mxu0 0.0
    %134 = vmatpush1.msra.mxu0 0.0
    %135 = vmatprep.subr.mxu0 0.0
    %136 = vmatpush1.msra.mxu0 0.0
    %137 = vmatprep.subr.mxu0 0.0
    %138 = vmatpush1.msra.mxu0 0.0
    %139 = vmatprep.subr.mxu0 0.0
    %140 = vmatpush1.msra.mxu0 0.0
    %141 = vmatprep.mubr.f32.mxu0 0.0
    %142 = vmatmul.mubr.f32.gmra.mrb[0].mxu0 %v72
    %v143 = vpop.f32.mrb[0].mxu0
    %v144 = vadd.f32 %v68, %v143
    %v145 = vpop.f32.mrb[0].mxu0
    %146 = vmatprep.mubr.f32.mxu0 0.0
    %147 = vmatmul.mubr.f32.gmra.mrb[0].mxu0 %v75
    %v148 = vpop.f32.mrb[0].mxu0
    %v149 = vadd.f32 %v68, %v148
    %v150 = vpop.f32.mrb[0].mxu0
    %151 = vdwg.mxu0
    %v152 = vmax.f32 %v144, 0.0
    %v153 = vmax.f32 %v149, 0.0
    %v154 = vld [vmem:[%s3] sm:$0x1]
    %v156 = vlaneseq
    %v157 = vshrl.u32 %v156, 7
    %v158 = vsub.s32 0, %v157
    %v159 = vrot.slane %v154, %v158
    %v161 = vmul.f32 %v152, %v159
    %v162 = vmul.f32 %v153, %v159
    %vm163 = vcmask 523264
    %v164 = vsel %vm163, %v161, 0.0
    %165 = vadd.xlane.f32.xlu0 %v164
    %v166 = vpop.xlane.xlu0 %165
    %v167 = vsel %vm163, %v162, 0.0
    %168 = vadd.xlane.f32.xlu0 %v167
    %v169 = vpop.xlane.xlu0 %168
    %s170 = sld [smem:[#allocation2]]
    %v171 = vstv %s170
    %v172 = vadd.f32 %v166, %v171
    %v173 = vadd.f32 %v169, %v171
    %v176 = vlaneseq
    %v177 = vand.u32 %v176, 127
    %v178 = vlaneseq
    %v179 = vshrl.u32 %v178, 7
    %v180 = vsub.s32 %v177, %v179
    %v181 = vrot.slane %v172, %v180
    %v182 = vlaneseq
    %v183 = vshrl.u32 %v182, 7
    %v184 = vsub.s32 %v177, %v183
    %v185 = vrot.slane %v173, %v184
    %vm186 = vcmask 1041409
    %v187 = vsel %vm186, %v185, %v181
    %vm189 = vcmask 58368
    %v190 = vsel %vm189, %v187, -inf
    %191 = vmax.xlane.f32.xlu0 %v190
    %v192 = vpop.xlane.xlu0 %191
    %v194 = vlaneseq
    %v195 = vshrl.u32 %v194, 7
    %v196 = vsub.s32 0, %v195
    %v197 = vrot.slane %v192, %v196
    %v198 = vlaneseq
    %v199 = vshrl.u32 %v198, 7
    %v200 = vsub.s32 1, %v199
    %v201 = vrot.slane %v192, %v200
    %v204 = vsub.f32 %v172, %v197
    %v205 = vsub.f32 %v173, %v201
    %v206 = vmul.f32 %v204, 1.442695
    %v207 = vpow.pop %v206
    %v208 = vmul.f32 %v205, 1.442695
    %v209 = vpow.pop %v208
    %212 = vset.pattern.permute.xlu0 0
    %213 = vperm.xlu0 %212, %v207
    %v214 = vpop.permute.xlu0 %213
    %215 = vset.pattern.permute.xlu0 0
    %216 = vperm.xlu0 %215, %v209
    %v217 = vpop.permute.xlu0 %216
    %v218 = vlaneseq
    %v219 = vshrl.u32 %v218, 7
    %v220 = vsub.s32 %v177, %v219
    %v221 = vrot.slane %v214, %v220
    %v222 = vlaneseq
    %v223 = vshrl.u32 %v222, 7
    %v224 = vsub.s32 %v177, %v223
    %v225 = vrot.slane %v217, %v224
    %v226 = vsel %vm186, %v225, %v221
    %v228 = vsel %vm189, %v226, 0.0
    %229 = vadd.xlane.f32.xlu0 %v228
    %v230 = vpop.xlane.xlu0 %229
    %v231 = vrcp.pop %v230
    %v233 = vlaneseq
    %v234 = vshrl.u32 %v233, 7
    %v235 = vsub.s32 0, %v234
    %v236 = vrot.slane %v231, %v235
    %v237 = vlaneseq
    %v238 = vshrl.u32 %v237, 7
    %v239 = vsub.s32 1, %v238
    %v240 = vrot.slane %v231, %v239
    %v243 = vmul.f32 %v207, %v236
    %v244 = vmul.f32 %v209, %v240
    %v245 = vld [vmem:[%s5] sm:$0x1]
    %v247 = vlaneseq
    %v248 = vshrl.u32 %v247, 7
    %v249 = vsub.s32 0, %v248
    %v250 = vrot.slane %v245, %v249
    %v252 = vmul.f32 %v57, %v250
    %v253 = vmul.f32 %v58, %v250
    %v254 = vsel %vm70, %v252, 0.0
    %255 = vadd.xlane.f32.xlu0 %v254
    %v256 = vpop.xlane.xlu0 %255
    %v257 = vsel %vm70, %v253, 0.0
    %258 = vadd.xlane.f32.xlu0 %v257
    %v259 = vpop.xlane.xlu0 %258
    %v260 = vmul.f32 %v243, %v256
    %v261 = vmul.f32 %v244, %v259
    %264 = vset.pattern.permute.xlu0 0
    %265 = vperm.xlu0 %264, %v260
    %v266 = vpop.permute.xlu0 %265
    %267 = vset.pattern.permute.xlu0 0
    %268 = vperm.xlu0 %267, %v261
    %v269 = vpop.permute.xlu0 %268
    %v270 = vlaneseq
    %v271 = vshrl.u32 %v270, 7
    %v272 = vsub.s32 %v177, %v271
    %v273 = vrot.slane %v266, %v272
    %v274 = vlaneseq
    %v275 = vshrl.u32 %v274, 7
    %v276 = vsub.s32 %v177, %v275
    %v277 = vrot.slane %v269, %v276
    %v278 = vsel %vm186, %v277, %v273
    %v280 = vsel %vm189, %v278, 0.0
    %281 = vadd.xlane.f32.xlu0 %v280
    %v282 = vpop.xlane.xlu0 %281
    %s283 = sld [smem:[#allocation3]]
    %v284 = vstv %s283
    %v285 = vadd.f32 %v282, %v284
    %v287 = vlaneseq
    %v288 = vshrl.u32 %v287, 7
    %v289 = vsub.s32 %v177, %v288
    %v290 = vrot.slane %v285, %v289
    %vm292 = vcmask 8192
    %293 = vst.msk [vmem:[#allocation9] sm:$0x1] %vm292, %v290
    // Predicated region
    $region38: #{tpu_custom_call.1} parent=1 // pred_check
      _
    $region39: #{tpu_custom_call.1} parent=1 // pred_check_branch
      %295 = sbr.rel (0) target = $region41
    $region40: #{tpu_custom_call.1} parent=1 // pred_region
      %s297 = ssub.s32 16, 16
      %298 = vsyncadd [#allocation6], %s297
      %s300 = sshll.u32 [#allocation9], 4
      %s301 = int_to_ptr.vmem [resolvable:$true] %s300
      %303 = dma.vmem_to_hbm [thread:$0]  %s301, 16, %s7, [#allocation6]
    $region41: #{tpu_custom_call.1} parent=1 // pred_fallthru
      _
    // Predicated region
    $region42: #{tpu_custom_call.1} parent=1 // pred_check
      _
    $region43: #{tpu_custom_call.1} parent=1 // pred_check_branch
      %305 = sbr.rel (0) target = $region45
    $region44: #{tpu_custom_call.1} parent=1 // pred_region
      %306 = dma.done [#allocation6], 16
    $region45: #{tpu_custom_call.1} parent=1 // pred_fallthru
      _
    %307 = vsyncpa [#allocation5], 1
    %308 = vsyncpa [#allocation8], 1
    %309 = vsyncpa [#allocation6], 1

</llo_original>
